<compile_context>
chip_gen: v7x
topology: tpu7x:2x2x1
jax: 0.10.0
libtpu: 0.0.40
codegen_flags: <defaults>
</compile_context>

<pallas_src>
from functools import partial

import jax
import jax.numpy as jnp
from jax import lax
from jax.experimental import pallas as pl
from jax.experimental.pallas import tpu as pltpu


def _round_up(x, m):
    return (x + m - 1) // m * m


def _eit_p_kernel(p_ref, w_ref, b_ref, o_ref, *, pool2, hw_out):
    """One batch element per grid step.

    p_ref : (1, pool2*hw_out, Kp) bf16  permuted im2col patches
    w_ref : (Kp, Ep)              bf16  packed conv weights
    b_ref : (1, Ep)               f32   conv bias (zero-padded)
    o_ref : (1, hw_out, Ep)       f32   pooled output, rows = oh*Wo + ow
    """
    # Single MXU matmul per image: (pool2*hw_out, Kp) @ (Kp, Ep), f32 accum.
    y = jnp.dot(p_ref[0], w_ref[...], preferred_element_type=jnp.float32)

    # Rows are ordered ((ph, pw) outer, (oh, ow) inner), so the 4x4 max-pool is
    # a fold over pool2 contiguous, 8-sublane-aligned (hw_out, Ep) slices.
    m = y[0:hw_out]
    for i in range(1, pool2):
        m = jnp.maximum(m, y[i * hw_out:(i + 1) * hw_out])

    # Bias hoisted past the max; one unmasked lane-dense (hw_out, Ep) store.
    o_ref[0] = m + b_ref[...]


def eit_p_forward(x_nchw, w_hwio, b, *, pool=4):
    """Pallas implementation of EIT_P.forward.

    x_nchw : (N, C, H, W) float32  (PyTorch NCHW convention)
    w_hwio : (KH, KW, C, E) float32 conv weights
    b      : (E,) float32 conv bias
    returns: (N, E, H//pool, W//pool) float32 (NCHW, like PyTorch)
    """
    N, C, H, W = x_nchw.shape
    KH, KW, wc, E = w_hwio.shape
    assert wc == C, "weight in-channels must match input channels"
    assert KH == KW and KH % 2 == 1, "odd square kernel expected (pad = k//2)"
    assert H % pool == 0 and W % pool == 0, "H, W must be divisible by pool"

    pad = KH // 2
    Ho, Wo = H // pool, W // pool
    hw_out = Ho * Wo
    pool2 = pool * pool
    K2C = KH * KW * C
    Kp = _round_up(K2C, 128)
    Ep = _round_up(E, 128)

    # ---- wrapper-side im2col (per perf review: 1 big MXU op, not 144) -----
    x = jnp.transpose(x_nchw, (0, 2, 3, 1)).astype(jnp.float32)      # NHWC
    x_pad = jnp.pad(x, ((0, 0), (pad, pad), (pad, pad), (0, 0)))
    shifts = jnp.stack(
        [x_pad[:, ky:ky + H, kx:kx + W, :]
         for ky in range(KH) for kx in range(KW)],
        axis=-2)                                                     # (N,H,W,KH*KW,C)
    patches = shifts.reshape(N, H, W, K2C)                           # col = (ky*KW+kx)*C+c
    # Permute rows so the pool window is the leading axis:
    #   row = (ph*pool + pw) * (Ho*Wo) + (oh*Wo + ow)
    patches = patches.reshape(N, Ho, pool, Wo, pool, K2C)
    patches = patches.transpose(0, 2, 4, 1, 3, 5).reshape(N, pool2 * hw_out, K2C)
    patches = jnp.pad(patches, ((0, 0), (0, 0), (0, Kp - K2C))).astype(jnp.bfloat16)

    w2 = w_hwio.reshape(K2C, E).astype(jnp.float32)                  # row matches col order
    w2 = jnp.pad(w2, ((0, Kp - K2C), (0, Ep - E))).astype(jnp.bfloat16)
    b2 = jnp.pad(b.astype(jnp.float32), (0, Ep - E)).reshape(1, Ep)

    out = pl.pallas_call(
        partial(_eit_p_kernel, pool2=pool2, hw_out=hw_out),
        out_shape=jax.ShapeDtypeStruct((N, hw_out, Ep), jnp.float32),
        grid_spec=pltpu.PrefetchScalarGridSpec(
            num_scalar_prefetch=0,
            grid=(N,),
            in_specs=[
                pl.BlockSpec((1, pool2 * hw_out, Kp), lambda n: (n, 0, 0)),
                pl.BlockSpec((Kp, Ep), lambda n: (0, 0)),
                pl.BlockSpec((1, Ep), lambda n: (0, 0)),
            ],
            out_specs=pl.BlockSpec((1, hw_out, Ep), lambda n: (n, 0, 0)),
        ),
        compiler_params=pltpu.CompilerParams(
            dimension_semantics=("parallel",)),
    )(patches, w2, b2)

    # Lane-dense (N, Ho*Wo, Ep) -> slice padding, reshape, NCHW (once, here).
    out = out[:, :, :E].reshape(N, Ho, Wo, E)
    return jnp.transpose(out, (0, 3, 1, 2))


def _reference(x_nchw, w_hwio, b, pool):
    """Pure-JAX reference (Conv2d pad=k//2 + MaxPool2d), with the same bf16
    operand rounding as the kernel so the comparison is apples-to-apples."""
    xq = x_nchw.astype(jnp.bfloat16).astype(jnp.float32)
    wq = w_hwio.astype(jnp.bfloat16).astype(jnp.float32)
    x = jnp.transpose(xq, (0, 2, 3, 1))
    y = lax.conv_general_dilated(
        x, wq, window_strides=(1, 1), padding="SAME",
        dimension_numbers=("NHWC", "HWIO", "NHWC"),
        precision=lax.Precision.HIGHEST) + b.astype(jnp.float32)
    y = lax.reduce_window(
        y, -jnp.inf, lax.max,
        window_dimensions=(1, pool, pool, 1),
        window_strides=(1, pool, pool, 1),
        padding="VALID")
    return jnp.transpose(y, (0, 3, 1, 2))


if __name__ == "__main__":
    # Module defaults: kernel_size=3, stride=1, pool_size=4, in_c=3, embed_dim=108
    N, C, H, W = 2, 3, 16, 16
    K, POOL, E = 3, 4, 108

    key = jax.random.PRNGKey(0)
    kx, kw, kb = jax.random.split(key, 3)
    x = jax.random.normal(kx, (N, C, H, W), jnp.float32)
    # Deterministic synthetic parameters (shapes per nn.Conv2d(in_c, embed_dim, 3)).
    w = 0.1 * jax.random.normal(kw, (K, K, C, E), jnp.float32)   # HWIO
    b = 0.1 * jax.random.normal(kb, (E,), jnp.float32)

    out = eit_p_forward(x, w, b, pool=POOL)
    out = jax.block_until_ready(out)

    assert out.shape == (N, E, H // POOL, W // POOL), out.shape
    ref = _reference(x, w, b, POOL)
    assert jnp.allclose(out, ref, atol=2e-3, rtol=2e-3), \
        float(jnp.max(jnp.abs(out - ref)))

    print("KERNEL_OK")
</pallas_src>

<mosaic_0001>
module attributes {stable_mosaic.version = 11 : i64} {
  func.func @_eit_p_kernel(%arg0: i32, %arg1: memref<1x256x128xbf16, #tpu.memory_space<vmem>>, %arg2: memref<128x128xbf16, #tpu.memory_space<vmem>>, %arg3: memref<1x128xf32, #tpu.memory_space<vmem>>, %arg4: memref<1x16x128xf32, #tpu.memory_space<vmem>>) attributes {dimension_semantics = [#tpu.dimension_semantics<parallel>], iteration_bounds = array<i64: 2>, scalar_prefetch = 0 : i64, scratch_operands = 0 : i64, tpu.core_type = #tpu.core_type<tc>, window_params = [{transform_indices = @transform_0, window_bounds = array<i64: 1, 256, 128>}, {pipeline_mode = #tpu.pipeline_mode<synchronous>, transform_indices = @transform_1, window_bounds = array<i64: 128, 128>}, {pipeline_mode = #tpu.pipeline_mode<synchronous>, transform_indices = @transform_2, window_bounds = array<i64: 1, 128>}, {transform_indices = @transform_3, window_bounds = array<i64: 1, 16, 128>}]} {
    %c0 = arith.constant 0 : index
    %c0_0 = arith.constant 0 : index
    %c0_1 = arith.constant 0 : index
    %0 = vector.load %arg1[%c0, %c0_0, %c0_1] : memref<1x256x128xbf16, #tpu.memory_space<vmem>>, vector<1x256x128xbf16>
    %1 = vector.shape_cast %0 : vector<1x256x128xbf16> to vector<256x128xbf16>
    %c0_2 = arith.constant 0 : index
    %c0_3 = arith.constant 0 : index
    %2 = vector.load %arg2[%c0_2, %c0_3] : memref<128x128xbf16, #tpu.memory_space<vmem>>, vector<128x128xbf16>
    %cst = arith.constant dense<0.000000e+00> : vector<256x128xf32>
    %3 = tpu.matmul %1, %2, %cst {dimension_numbers = #tpu.dot_dimension_numbers<[1], [0], [0], [1], [0, 0, 1, 1], [], []>} : vector<256x128xbf16>, vector<128x128xbf16>, vector<256x128xf32> -> vector<256x128xf32>
    %4 = vector.extract_strided_slice %3 {offsets = [0, 0], sizes = [16, 128], strides = [1, 1]} : vector<256x128xf32> to vector<16x128xf32>
    %5 = vector.extract_strided_slice %3 {offsets = [16, 0], sizes = [16, 128], strides = [1, 1]} : vector<256x128xf32> to vector<16x128xf32>
    %6 = arith.maximumf %4, %5 : vector<16x128xf32>
    %7 = vector.extract_strided_slice %3 {offsets = [32, 0], sizes = [16, 128], strides = [1, 1]} : vector<256x128xf32> to vector<16x128xf32>
    %8 = arith.maximumf %6, %7 : vector<16x128xf32>
    %9 = vector.extract_strided_slice %3 {offsets = [48, 0], sizes = [16, 128], strides = [1, 1]} : vector<256x128xf32> to vector<16x128xf32>
    %10 = arith.maximumf %8, %9 : vector<16x128xf32>
    %11 = vector.extract_strided_slice %3 {offsets = [64, 0], sizes = [16, 128], strides = [1, 1]} : vector<256x128xf32> to vector<16x128xf32>
    %12 = arith.maximumf %10, %11 : vector<16x128xf32>
    %13 = vector.extract_strided_slice %3 {offsets = [80, 0], sizes = [16, 128], strides = [1, 1]} : vector<256x128xf32> to vector<16x128xf32>
    %14 = arith.maximumf %12, %13 : vector<16x128xf32>
    %15 = vector.extract_strided_slice %3 {offsets = [96, 0], sizes = [16, 128], strides = [1, 1]} : vector<256x128xf32> to vector<16x128xf32>
    %16 = arith.maximumf %14, %15 : vector<16x128xf32>
    %17 = vector.extract_strided_slice %3 {offsets = [112, 0], sizes = [16, 128], strides = [1, 1]} : vector<256x128xf32> to vector<16x128xf32>
    %18 = arith.maximumf %16, %17 : vector<16x128xf32>
    %19 = vector.extract_strided_slice %3 {offsets = [128, 0], sizes = [16, 128], strides = [1, 1]} : vector<256x128xf32> to vector<16x128xf32>
    %20 = arith.maximumf %18, %19 : vector<16x128xf32>
    %21 = vector.extract_strided_slice %3 {offsets = [144, 0], sizes = [16, 128], strides = [1, 1]} : vector<256x128xf32> to vector<16x128xf32>
    %22 = arith.maximumf %20, %21 : vector<16x128xf32>
    %23 = vector.extract_strided_slice %3 {offsets = [160, 0], sizes = [16, 128], strides = [1, 1]} : vector<256x128xf32> to vector<16x128xf32>
    %24 = arith.maximumf %22, %23 : vector<16x128xf32>
    %25 = vector.extract_strided_slice %3 {offsets = [176, 0], sizes = [16, 128], strides = [1, 1]} : vector<256x128xf32> to vector<16x128xf32>
    %26 = arith.maximumf %24, %25 : vector<16x128xf32>
    %27 = vector.extract_strided_slice %3 {offsets = [192, 0], sizes = [16, 128], strides = [1, 1]} : vector<256x128xf32> to vector<16x128xf32>
    %28 = arith.maximumf %26, %27 : vector<16x128xf32>
    %29 = vector.extract_strided_slice %3 {offsets = [208, 0], sizes = [16, 128], strides = [1, 1]} : vector<256x128xf32> to vector<16x128xf32>
    %30 = arith.maximumf %28, %29 : vector<16x128xf32>
    %31 = vector.extract_strided_slice %3 {offsets = [224, 0], sizes = [16, 128], strides = [1, 1]} : vector<256x128xf32> to vector<16x128xf32>
    %32 = arith.maximumf %30, %31 : vector<16x128xf32>
    %33 = vector.extract_strided_slice %3 {offsets = [240, 0], sizes = [16, 128], strides = [1, 1]} : vector<256x128xf32> to vector<16x128xf32>
    %34 = arith.maximumf %32, %33 : vector<16x128xf32>
    %c0_4 = arith.constant 0 : index
    %c0_5 = arith.constant 0 : index
    %35 = vector.load %arg3[%c0_4, %c0_5] : memref<1x128xf32, #tpu.memory_space<vmem>>, vector<1x128xf32>
    %36 = vector.broadcast %35 : vector<1x128xf32> to vector<16x128xf32>
    %37 = arith.addf %34, %36 : vector<16x128xf32>
    %c0_6 = arith.constant 0 : index
    %c0_7 = arith.constant 0 : index
    %c0_8 = arith.constant 0 : index
    %38 = vector.load %arg4[%c0_6, %c0_7, %c0_8] : memref<1x16x128xf32, #tpu.memory_space<vmem>>, vector<1x16x128xf32>
    %39 = vector.shape_cast %38 : vector<1x16x128xf32> to vector<16x128xf32>
    %40 = vector.shape_cast %37 : vector<16x128xf32> to vector<1x16x128xf32>
    tpu.vector_store %arg4[%c0_6, %c0_7, %c0_8], %40 {strides = array<i32>} : memref<1x16x128xf32, #tpu.memory_space<vmem>>, vector<1x16x128xf32>,
    return
  }
  func.func @transform_0(%arg0: i32) -> (i32, i32, i32) {
    %c0_i32 = arith.constant 0 : i32
    %c0_i32_0 = arith.constant 0 : i32
    %c0_i32_1 = arith.constant 0 : i32
    return %arg0, %c0_i32, %c0_i32_0 : i32, i32, i32
  }
  func.func @transform_1(%arg0: i32) -> (i32, i32) {
    %c0_i32 = arith.constant 0 : i32
    %c0_i32_0 = arith.constant 0 : i32
    %c0_i32_1 = arith.constant 0 : i32
    return %c0_i32, %c0_i32_0 : i32, i32
  }
  func.func @transform_2(%arg0: i32) -> (i32, i32) {
    %c0_i32 = arith.constant 0 : i32
    %c0_i32_0 = arith.constant 0 : i32
    %c0_i32_1 = arith.constant 0 : i32
    return %c0_i32, %c0_i32_0 : i32, i32
  }
  func.func @transform_3(%arg0: i32) -> (i32, i32, i32) {
    %c0_i32 = arith.constant 0 : i32
    %c0_i32_0 = arith.constant 0 : i32
    %c0_i32_1 = arith.constant 0 : i32
    return %arg0, %c0_i32, %c0_i32_0 : i32, i32, i32
  }
}

</mosaic_0001>

<llo_original>
// kernel: tpu_custom_call.1
$region0: #{tpu_custom_call.1}
  #allocation0 [shape = 'u32[]', space=smem, size = 0x4, offset = 0x4, fixed_abs, tag = 'smem constant byte address 0x4 - core index']
  #allocation1 [shape = 'u32[144,128]{1,0:T(1,128)}', space=vmem, size = 0x12000, scoped, tag = 'internal scratch']
  %s0 = inlined_call_operand.hbm [shape: bf16[2,256,128], index: 0, kind: input, shape index: {}]
  %s1 = inlined_call_operand.hbm [shape: bf16[128,128], index: 1, kind: input, shape index: {}]
  %s2 = inlined_call_operand.vmem [shape: f32[1,128], index: 2, kind: input, shape index: {}]
  %s3 = inlined_call_operand.hbm [shape: f32[2,16,128], index: 3, kind: output, shape index: {}]
  %s4 = sld [smem:[#allocation0]]
  $region53: #{tpu_custom_call.1} parent=0
    _
  %s6 = ssub.s32 1, %s4
  %s7 = scalar_select 0, %s6, %s4
  $region1: #{tpu_custom_call.1} parent=0
    #allocation2 [shape = 'u8[131072]{0}', space=vmem, size = 0x20000, scoped, tag = 'input window, operand 0']
    #allocation3 [shape = 's32[2]{0}', space=sflag, size = 0x8, scoped, tag = 'scoped memory for tpu_custom_call.1']
    #allocation4 [shape = 's32[2]{0}', space=sflag, size = 0x8, scoped, tag = 'scoped memory for tpu_custom_call.1']
    #allocation5 [shape = 'u8[32768]{0}', space=vmem, size = 0x8000, scoped, tag = 'input window, operand 1, single buffered']
    #allocation6 [shape = 's32[1]{0}', space=sflag, size = 0x4, scoped, tag = 'scoped memory for tpu_custom_call.1']
    #allocation7 [shape = 'u8[16384]{0}', space=vmem, size = 0x4000, scoped, tag = 'output window, operand 0']
    %8 = vsyncpa [#allocation3], 0
    %s9 = scalar_lea.sflag [#allocation3], 1
    %10 = vsyncpa %s9, 0
    %11 = vsyncpa [#allocation6], 0
    %12 = vsyncpa [#allocation4], 0
    %s13 = scalar_lea.sflag [#allocation4], 1
    %14 = vsyncpa %s13, 0
    loop: start=0, step=1, limit=4
    $region2: #{tpu_custom_call.1} parent=1 // loop_pre_header
      _
    $region3: #{tpu_custom_call.1} parent=1 // loop_header
      %s16 = sphi 0, %s20
      %p17 = scmp.ge.s32.totalorder %s16, 4
      %s26 = sphi 0, %s28
      %s29 = sphi 0, %s26
      %s30 = sphi 0, %s29
      %s46 = sphi 0, %s30
      %s50 = sphi 0, %s50
      %s52 = sphi 0, %s50
      %s53 = sphi 0, %s52
      %s67 = sphi 0, %s53
      %s71 = sphi 0, %s71
      %s73 = sphi 0, %s71
      %s74 = sphi 0, %s73
      %s88 = sphi 0, %s74
      %s94 = sphi 0, %s96
      %s97 = sphi 0, %s94
      %s98 = sphi 0, %s97
      %s114 = sphi 0, %s98
    $region4: #{tpu_custom_call.1} parent=1 // loop_header_branch
      %19 = sbr.rel (%p17) target = $region8
    $region5: #{tpu_custom_call.1} parent=1 // loop_body
      %s21 = ssub.s32 %s16, 1
      %s22 = ssub.s32 %s16, 2
      %s23 = sadd.s32 %s16, 1
      %s24 = ssub.s32 %s16, %s23
      %p25 = scmp.eq.s32.totalorder %s24, 0
      %s27 = sadd.s32 %s26, 1
      %s28 = scalar_select %p25, %s26, %s27
      %p31 = pneg %p25
      %p32 = scmp.eq.s32.totalorder %s16, 1
      %p33 = por %p31, %p32
      %p34 = scmp.ne.s32.totalorder %s26, %s29
      %p35 = scmp.eq.s32.totalorder %s16, 0
      %p36 = por %p34, %p35
      %p37 = scmp.ne.s32.totalorder %s26, %s29
      %p38 = scmp.eq.s32.totalorder %s21, 1
      %p39 = por %p37, %p38
      %p40 = scmp.ne.s32.totalorder %s29, %s30
      %p41 = scmp.eq.s32.totalorder %s21, 0
      %p42 = por %p40, %p41
      %p43 = scmp.ne.s32.totalorder %s29, %s30
      %p44 = scmp.eq.s32.totalorder %s22, 1
      %p45 = por %p43, %p44
      %p47 = scmp.ne.s32.totalorder %s30, %s46
      %p48 = scmp.eq.s32.totalorder %s22, 0
      %p49 = por %p47, %p48
      %s51 = sadd.s32 %s50, 1
      %p54 = scmp.eq.s32.totalorder %s16, 1
      %p55 = scmp.ne.s32.totalorder %s50, %s52
      %p56 = scmp.eq.s32.totalorder %s16, 0
      %p57 = por %p55, %p56
      %p58 = scmp.ne.s32.totalorder %s50, %s52
      %p59 = scmp.eq.s32.totalorder %s21, 1
      %p60 = por %p58, %p59
      %p61 = scmp.ne.s32.totalorder %s52, %s53
      %p62 = scmp.eq.s32.totalorder %s21, 0
      %p63 = por %p61, %p62
      %p64 = scmp.ne.s32.totalorder %s52, %s53
      %p65 = scmp.eq.s32.totalorder %s22, 1
      %p66 = por %p64, %p65
      %p68 = scmp.ne.s32.totalorder %s53, %s67
      %p69 = scmp.eq.s32.totalorder %s22, 0
      %p70 = por %p68, %p69
      %s72 = sadd.s32 %s71, 1
      %p75 = scmp.eq.s32.totalorder %s16, 1
      %p76 = scmp.ne.s32.totalorder %s71, %s73
      %p77 = scmp.eq.s32.totalorder %s16, 0
      %p78 = por %p76, %p77
      %p79 = scmp.ne.s32.totalorder %s71, %s73
      %p80 = scmp.eq.s32.totalorder %s21, 1
      %p81 = por %p79, %p80
      %p82 = scmp.ne.s32.totalorder %s73, %s74
      %p83 = scmp.eq.s32.totalorder %s21, 0
      %p84 = por %p82, %p83
      %p85 = scmp.ne.s32.totalorder %s73, %s74
      %p86 = scmp.eq.s32.totalorder %s22, 1
      %p87 = por %p85, %p86
      %p89 = scmp.ne.s32.totalorder %s74, %s88
      %p90 = scmp.eq.s32.totalorder %s22, 0
      %p91 = por %p89, %p90
      %s92 = ssub.s32 %s16, %s23
      %p93 = scmp.eq.s32.totalorder %s92, 0
      %s95 = sadd.s32 %s94, 1
      %s96 = scalar_select %p93, %s94, %s95
      %p99 = pneg %p93
      %p100 = scmp.eq.s32.totalorder %s16, 1
      %p101 = por %p99, %p100
      %p102 = scmp.ne.s32.totalorder %s94, %s97
      %p103 = scmp.eq.s32.totalorder %s16, 0
      %p104 = por %p102, %p103
      %p105 = scmp.ne.s32.totalorder %s94, %s97
      %p106 = scmp.eq.s32.totalorder %s21, 1
      %p107 = por %p105, %p106
      %p108 = scmp.ne.s32.totalorder %s97, %s98
      %p109 = scmp.eq.s32.totalorder %s21, 0
      %p110 = por %p108, %p109
      %p111 = scmp.ne.s32.totalorder %s97, %s98
      %p112 = scmp.eq.s32.totalorder %s22, 1
      %p113 = por %p111, %p112
      %p115 = scmp.ne.s32.totalorder %s98, %s114
      %p116 = scmp.eq.s32.totalorder %s22, 0
      %p117 = por %p115, %p116
      %p118 = scmp.le.s32.totalorder 1, %s16
      %p119 = scmp.lt.s32.totalorder %s16, 3
      %p120 = pnand %p118, %p119
      %p121 = pneg %p120
      // Predicated region
      $region9: #{tpu_custom_call.1} parent=5 // pred_check
        _
      $region10: #{tpu_custom_call.1} parent=5 // pred_check_branch
        %123 = sbr.rel (%p120) target = $region12
      $region11: #{tpu_custom_call.1} parent=5 // pred_region
        %s124 = ssub.s32 %s16, 1
        // Predicated region
        $region13: #{tpu_custom_call.1} parent=11 // pred_check
          %p125 = pneg %p63
        $region14: #{tpu_custom_call.1} parent=11 // pred_check_branch
          %127 = sbr.rel (%p125) target = $region16
        $region15: #{tpu_custom_call.1} parent=11 // pred_region
          %s129 = ssub.s32 1024, 1024
          %130 = vsyncadd [#allocation6], %s129
          %s131 = sshll.u32 [#allocation5], 4
          %s132 = int_to_ptr.vmem [resolvable:$true] %s131
          %137 = dma.hbm_to_vmem [thread:$0]  %s1, 1024, %s132, [#allocation6], 64, 64, 4
        $region16: #{tpu_custom_call.1} parent=11 // pred_fallthru
          _
        // Predicated region
        $region17: #{tpu_custom_call.1} parent=11 // pred_check
          %p138 = pneg %p84
        $region18: #{tpu_custom_call.1} parent=11 // pred_check_branch
          %140 = sbr.rel (%p138) target = $region20
        $region19: #{tpu_custom_call.1} parent=11 // pred_region
          _
        $region20: #{tpu_custom_call.1} parent=11 // pred_fallthru
          _
      $region12: #{tpu_custom_call.1} parent=5 // pred_fallthru
        _
      %p141 = scmp.lt.s32.totalorder %s16, 2
      // Predicated region
      $region21: #{tpu_custom_call.1} parent=5 // pred_check
        %p142 = pneg %p141
      $region22: #{tpu_custom_call.1} parent=5 // pred_check_branch
        %144 = sbr.rel (%p142) target = $region24
      $region23: #{tpu_custom_call.1} parent=5 // pred_region
        // Predicated region
        $region25: #{tpu_custom_call.1} parent=23 // pred_check
          %p145 = pneg %p36
        $region26: #{tpu_custom_call.1} parent=23 // pred_check_branch
          %147 = sbr.rel (%p145) target = $region28
        $region27: #{tpu_custom_call.1} parent=23 // pred_region
          %s148 = sand.u32 %s26, 1
          %s149 = scalar_lea.sflag [#allocation3], %s148
          %s150 = sand.u32 %s26, 1
          %s151 = smul.addr %s150, 128
          %s152 = scalar_lea.vmem [#allocation2], %s151
          %s154 = ssub.s32 2048, 2048
          %155 = vsyncadd %s149, %s154
          %s156 = smul.addr %s16, 32
          %s157 = smul.addr %s156, 64
          %s158 = scalar_lea.hbm %s0, %s157
          %s159 = sshll.u32 %s152, 4
          %s160 = int_to_ptr.vmem [resolvable:$true] %s159
          %165 = dma.hbm_to_vmem [thread:$0]  %s158, 2048, %s160, %s149, 64, 64, 4
        $region28: #{tpu_custom_call.1} parent=23 // pred_fallthru
          _
      $region24: #{tpu_custom_call.1} parent=5 // pred_fallthru
        _
      %p166 = scmp.le.s32.totalorder 1, %s16
      %p167 = scmp.lt.s32.totalorder %s16, 3
      %p168 = pnand %p166, %p167
      %p169 = pneg %p168
      // Predicated region
      $region29: #{tpu_custom_call.1} parent=5 // pred_check
        _
      $region30: #{tpu_custom_call.1} parent=5 // pred_check_branch
        %171 = sbr.rel (%p168) target = $region32
      $region31: #{tpu_custom_call.1} parent=5 // pred_region
        %s172 = ssub.s32 %s16, 1
        %s173 = sand.u32 %s29, 1
        %s174 = scalar_lea.sflag [#allocation3], %s173
        %s175 = sand.u32 %s29, 1
        %s176 = smul.addr %s175, 128
        %s177 = scalar_lea.vmem [#allocation2], %s176
        // Predicated region
        $region33: #{tpu_custom_call.1} parent=31 // pred_check
          %p178 = pneg %p42
        $region34: #{tpu_custom_call.1} parent=31 // pred_check_branch
          %180 = sbr.rel (%p178) target = $region36
        $region35: #{tpu_custom_call.1} parent=31 // pred_region
          %181 = dma.done %s174, 2048
        $region36: #{tpu_custom_call.1} parent=31 // pred_fallthru
          _
        // Predicated region
        $region37: #{tpu_custom_call.1} parent=31 // pred_check
          %p182 = pneg %p63
        $region38: #{tpu_custom_call.1} parent=31 // pred_check_branch
          %184 = sbr.rel (%p182) target = $region40
        $region39: #{tpu_custom_call.1} parent=31 // pred_region
          %185 = dma.done [#allocation6], 1024
        $region40: #{tpu_custom_call.1} parent=31 // pred_fallthru
          _
        %s186 = sand.u32 %s29, 1
        %s187 = scalar_lea.sflag [#allocation3], %s186
        %s188 = sand.u32 %s29, 1
        %s189 = smul.addr %s188, 128
        %s190 = scalar_lea.vmem [#allocation2], %s189
        %p191 = pneg %p42
        %p192 = pneg %p39
        %p193 = pneg %p63
        %p194 = pneg %p60
        %p195 = pneg %p84
        %p196 = pneg %p81
        %p197 = pneg %p110
        %p198 = pneg %p107
        %s199 = sand.u32 %s97, 1
        %s200 = scalar_lea.sflag [#allocation4], %s199
        %s201 = sand.u32 %s97, 1
        %s202 = smul.addr %s201, 16
        %s203 = scalar_lea.vmem [#allocation7], %s202
        %v205 = vld [vmem:[%s177] sm:$0xf]
        %v206 = vld [vmem:[%s177 + $0x4] sm:$0xf]
        %v207 = vld [vmem:[%s177 + $0x8] sm:$0xf]
        %v208 = vld [vmem:[%s177 + $0xc] sm:$0xf]
        %v209 = vld [vmem:[%s177 + $0x10] sm:$0xf]
        %v210 = vld [vmem:[%s177 + $0x14] sm:$0xf]
        %v211 = vld [vmem:[%s177 + $0x18] sm:$0xf]
        %v212 = vld [vmem:[%s177 + $0x1c] sm:$0xf]
        %v213 = vld [vmem:[%s177 + $0x20] sm:$0xf]
        %v214 = vld [vmem:[%s177 + $0x24] sm:$0xf]
        %v215 = vld [vmem:[%s177 + $0x28] sm:$0xf]
        %v216 = vld [vmem:[%s177 + $0x2c] sm:$0xf]
        %v217 = vld [vmem:[%s177 + $0x30] sm:$0xf]
        %v218 = vld [vmem:[%s177 + $0x34] sm:$0xf]
        %v219 = vld [vmem:[%s177 + $0x38] sm:$0xf]
        %v220 = vld [vmem:[%s177 + $0x3c] sm:$0xf]
        %v221 = vld [vmem:[%s177 + $0x40] sm:$0xf]
        %v222 = vld [vmem:[%s177 + $0x44] sm:$0xf]
        %v223 = vld [vmem:[%s177 + $0x48] sm:$0xf]
        %v224 = vld [vmem:[%s177 + $0x4c] sm:$0xf]
        %v225 = vld [vmem:[%s177 + $0x50] sm:$0xf]
        %v226 = vld [vmem:[%s177 + $0x54] sm:$0xf]
        %v227 = vld [vmem:[%s177 + $0x58] sm:$0xf]
        %v228 = vld [vmem:[%s177 + $0x5c] sm:$0xf]
        %v229 = vld [vmem:[%s177 + $0x60] sm:$0xf]
        %v230 = vld [vmem:[%s177 + $0x64] sm:$0xf]
        %v231 = vld [vmem:[%s177 + $0x68] sm:$0xf]
        %v232 = vld [vmem:[%s177 + $0x6c] sm:$0xf]
        %v233 = vld [vmem:[%s177 + $0x70] sm:$0xf]
        %v234 = vld [vmem:[%s177 + $0x74] sm:$0xf]
        %v235 = vld [vmem:[%s177 + $0x78] sm:$0xf]
        %v236 = vld [vmem:[%s177 + $0x7c] sm:$0xf]
        %v237 = vld [vmem:[#allocation5] sm:$0xf]
        %v238 = vld [vmem:[#allocation5 + $0x4] sm:$0xf]
        %v239 = vld [vmem:[#allocation5 + $0x8] sm:$0xf]
        %v240 = vld [vmem:[#allocation5 + $0xc] sm:$0xf]
        %v241 = vld [vmem:[#allocation5 + $0x10] sm:$0xf]
        %v242 = vld [vmem:[#allocation5 + $0x14] sm:$0xf]
        %v243 = vld [vmem:[#allocation5 + $0x18] sm:$0xf]
        %v244 = vld [vmem:[#allocation5 + $0x1c] sm:$0xf]
        %v245 = vld [vmem:[#allocation5 + $0x20] sm:$0xf]
        %v246 = vld [vmem:[#allocation5 + $0x24] sm:$0xf]
        %v247 = vld [vmem:[#allocation5 + $0x28] sm:$0xf]
        %v248 = vld [vmem:[#allocation5 + $0x2c] sm:$0xf]
        %v249 = vld [vmem:[#allocation5 + $0x30] sm:$0xf]
        %v250 = vld [vmem:[#allocation5 + $0x34] sm:$0xf]
        %v251 = vld [vmem:[#allocation5 + $0x38] sm:$0xf]
        %v252 = vld [vmem:[#allocation5 + $0x3c] sm:$0xf]
        %v285 = vunpack.c.l.b16 %v205
        %v286 = vunpack.c.l.b16 %v206
        %v287 = vunpack.c.l.b16 %v207
        %v288 = vunpack.c.l.b16 %v208
        %v289 = vunpack.c.l.b16 %v209
        %v290 = vunpack.c.l.b16 %v210
        %v291 = vunpack.c.l.b16 %v211
        %v292 = vunpack.c.l.b16 %v212
        %v293 = vunpack.c.l.b16 %v213
        %v294 = vunpack.c.l.b16 %v214
        %v295 = vunpack.c.l.b16 %v215
        %v296 = vunpack.c.l.b16 %v216
        %v297 = vunpack.c.l.b16 %v217
        %v298 = vunpack.c.l.b16 %v218
        %v299 = vunpack.c.l.b16 %v219
        %v300 = vunpack.c.l.b16 %v220
        %v301 = vunpack.c.l.b16 %v221
        %v302 = vunpack.c.l.b16 %v222
        %v303 = vunpack.c.l.b16 %v223
        %v304 = vunpack.c.l.b16 %v224
        %v305 = vunpack.c.l.b16 %v225
        %v306 = vunpack.c.l.b16 %v226
        %v307 = vunpack.c.l.b16 %v227
        %v308 = vunpack.c.l.b16 %v228
        %v309 = vunpack.c.l.b16 %v229
        %v310 = vunpack.c.l.b16 %v230
        %v311 = vunpack.c.l.b16 %v231
        %v312 = vunpack.c.l.b16 %v232
        %v313 = vunpack.c.l.b16 %v233
        %v314 = vunpack.c.l.b16 %v234
        %v315 = vunpack.c.l.b16 %v235
        %v316 = vunpack.c.l.b16 %v236
        %v317 = vpack.c.b16 %v286, %v285
        %v318 = vpack.c.b16 %v288, %v287
        %v319 = vpack.c.b16 %v290, %v289
        %v320 = vpack.c.b16 %v292, %v291
        %v321 = vpack.c.b16 %v294, %v293
        %v322 = vpack.c.b16 %v296, %v295
        %v323 = vpack.c.b16 %v298, %v297
        %v324 = vpack.c.b16 %v300, %v299
        %v325 = vpack.c.b16 %v302, %v301
        %v326 = vpack.c.b16 %v304, %v303
        %v327 = vpack.c.b16 %v306, %v305
        %v328 = vpack.c.b16 %v308, %v307
        %v329 = vpack.c.b16 %v310, %v309
        %v330 = vpack.c.b16 %v312, %v311
        %v331 = vpack.c.b16 %v314, %v313
        %v332 = vpack.c.b16 %v316, %v315
        %v365 = vunpack.c.l.b16 %v237
        %v366 = vunpack.c.l.b16 %v238
        %v367 = vunpack.c.l.b16 %v239
        %v368 = vunpack.c.l.b16 %v240
        %v369 = vunpack.c.l.b16 %v241
        %v370 = vunpack.c.l.b16 %v242
        %v371 = vunpack.c.l.b16 %v243
        %v372 = vunpack.c.l.b16 %v244
        %v373 = vunpack.c.l.b16 %v245
        %v374 = vunpack.c.l.b16 %v246
        %v375 = vunpack.c.l.b16 %v247
        %v376 = vunpack.c.l.b16 %v248
        %v377 = vunpack.c.l.b16 %v249
        %v378 = vunpack.c.l.b16 %v250
        %v379 = vunpack.c.l.b16 %v251
        %v380 = vunpack.c.l.b16 %v252
        %v381 = vpack.c.b16 %v366, %v365
        %v382 = vpack.c.b16 %v368, %v367
        %v383 = vpack.c.b16 %v370, %v369
        %v384 = vpack.c.b16 %v372, %v371
        %v385 = vpack.c.b16 %v374, %v373
        %v386 = vpack.c.b16 %v376, %v375
        %v387 = vpack.c.b16 %v378, %v377
        %v388 = vpack.c.b16 %v380, %v379
        %397 = vmatprep.subr.bf16.mxu0 0
        %398 = vmatpush1.bf16.msra.mxu0 %v381
        %399 = vmatprep.subr.bf16.mxu0 0
        %400 = vmatpush1.bf16.msra.mxu0 %v382
        %401 = vmatprep.subr.bf16.mxu0 0
        %402 = vmatpush1.bf16.msra.mxu0 %v383
        %403 = vmatprep.subr.bf16.mxu0 0
        %404 = vmatpush1.bf16.msra.mxu0 %v384
        %405 = vmatprep.subr.bf16.mxu0 0
        %406 = vmatpush1.bf16.msra.mxu0 %v385
        %407 = vmatprep.subr.bf16.mxu0 0
        %408 = vmatpush1.bf16.msra.mxu0 %v386
        %409 = vmatprep.subr.bf16.mxu0 0
        %410 = vmatpush1.bf16.msra.mxu0 %v387
        %411 = vmatprep.subr.bf16.mxu0 0
        %412 = vmatpush1.bf16.msra.mxu0 %v388
        %413 = vmatprep.subr.bf16.mxu0 0
        %414 = vmatpush1.bf16.msra.mxu0 0
        %415 = vmatprep.subr.bf16.mxu0 0
        %416 = vmatpush1.bf16.msra.mxu0 0
        %417 = vmatprep.subr.bf16.mxu0 0
        %418 = vmatpush1.bf16.msra.mxu0 0
        %419 = vmatprep.subr.bf16.mxu0 0
        %420 = vmatpush1.bf16.msra.mxu0 0
        %421 = vmatprep.subr.bf16.mxu0 0
        %422 = vmatpush1.bf16.msra.mxu0 0
        %423 = vmatprep.subr.bf16.mxu0 0
        %424 = vmatpush1.bf16.msra.mxu0 0
        %425 = vmatprep.subr.bf16.mxu0 0
        %426 = vmatpush1.bf16.msra.mxu0 0
        %427 = vmatprep.subr.bf16.mxu0 0
        %428 = vmatpush1.bf16.msra.mxu0 0
        %429 = vmatprep.mubr.bf16.mxu0 0
        %430 = vmatmul.mubr.bf16.gmra.mrb[0].mxu0 %v317
        %v431 = vpop.f32.mrb[0].mxu0
        %v432 = vadd.f32 0.0, %v431
        %v433 = vpop.f32.mrb[0].mxu0
        %v434 = vpop.f32.mrb[0].mxu0
        %v435 = vadd.f32 0.0, %v434
        %v436 = vpop.f32.mrb[0].mxu0
        %437 = vmatprep.mubr.bf16.mxu0 0
        %438 = vmatmul.mubr.bf16.gmra.mrb[0].mxu0 %v318
        %v439 = vpop.f32.mrb[0].mxu0
        %v440 = vadd.f32 0.0, %v439
        %v441 = vpop.f32.mrb[0].mxu0
        %v442 = vpop.f32.mrb[0].mxu0
        %v443 = vadd.f32 0.0, %v442
        %v444 = vpop.f32.mrb[0].mxu0
        %445 = vmatprep.mubr.bf16.mxu0 0
        %446 = vmatmul.mubr.bf16.gmra.mrb[0].mxu0 %v319
        %v447 = vpop.f32.mrb[0].mxu0
        %v448 = vadd.f32 0.0, %v447
        %v449 = vpop.f32.mrb[0].mxu0
        %v450 = vpop.f32.mrb[0].mxu0
        %v451 = vadd.f32 0.0, %v450
        %v452 = vpop.f32.mrb[0].mxu0
        %453 = vmatprep.mubr.bf16.mxu0 0
        %454 = vmatmul.mubr.bf16.gmra.mrb[0].mxu0 %v320
        %v455 = vpop.f32.mrb[0].mxu0
        %v456 = vadd.f32 0.0, %v455
        %v457 = vpop.f32.mrb[0].mxu0
        %v458 = vpop.f32.mrb[0].mxu0
        %v459 = vadd.f32 0.0, %v458
        %v460 = vpop.f32.mrb[0].mxu0
        %461 = vmatprep.mubr.bf16.mxu0 0
        %462 = vmatmul.mubr.bf16.gmra.mrb[0].mxu0 %v321
        %v463 = vpop.f32.mrb[0].mxu0
        %v464 = vadd.f32 0.0, %v463
        %v465 = vpop.f32.mrb[0].mxu0
        %v466 = vpop.f32.mrb[0].mxu0
        %v467 = vadd.f32 0.0, %v466
        %v468 = vpop.f32.mrb[0].mxu0
        %469 = vmatprep.mubr.bf16.mxu0 0
        %470 = vmatmul.mubr.bf16.gmra.mrb[0].mxu0 %v322
        %v471 = vpop.f32.mrb[0].mxu0
        %v472 = vadd.f32 0.0, %v471
        %v473 = vpop.f32.mrb[0].mxu0
        %v474 = vpop.f32.mrb[0].mxu0
        %v475 = vadd.f32 0.0, %v474
        %v476 = vpop.f32.mrb[0].mxu0
        %477 = vmatprep.mubr.bf16.mxu0 0
        %478 = vmatmul.mubr.bf16.gmra.mrb[0].mxu0 %v323
        %v479 = vpop.f32.mrb[0].mxu0
        %v480 = vadd.f32 0.0, %v479
        %v481 = vpop.f32.mrb[0].mxu0
        %v482 = vpop.f32.mrb[0].mxu0
        %v483 = vadd.f32 0.0, %v482
        %v484 = vpop.f32.mrb[0].mxu0
        %485 = vmatprep.mubr.bf16.mxu0 0
        %486 = vmatmul.mubr.bf16.gmra.mrb[0].mxu0 %v324
        %v487 = vpop.f32.mrb[0].mxu0
        %v488 = vadd.f32 0.0, %v487
        %v489 = vpop.f32.mrb[0].mxu0
        %v490 = vpop.f32.mrb[0].mxu0
        %v491 = vadd.f32 0.0, %v490
        %v492 = vpop.f32.mrb[0].mxu0
        %493 = vmatprep.mubr.bf16.mxu0 0
        %494 = vmatmul.mubr.bf16.gmra.mrb[0].mxu0 %v325
        %v495 = vpop.f32.mrb[0].mxu0
        %v496 = vadd.f32 0.0, %v495
        %v497 = vpop.f32.mrb[0].mxu0
        %v498 = vpop.f32.mrb[0].mxu0
        %v499 = vadd.f32 0.0, %v498
        %v500 = vpop.f32.mrb[0].mxu0
        %501 = vmatprep.mubr.bf16.mxu0 0
        %502 = vmatmul.mubr.bf16.gmra.mrb[0].mxu0 %v326
        %v503 = vpop.f32.mrb[0].mxu0
        %v504 = vadd.f32 0.0, %v503
        %v505 = vpop.f32.mrb[0].mxu0
        %v506 = vpop.f32.mrb[0].mxu0
        %v507 = vadd.f32 0.0, %v506
        %v508 = vpop.f32.mrb[0].mxu0
        %509 = vmatprep.mubr.bf16.mxu0 0
        %510 = vmatmul.mubr.bf16.gmra.mrb[0].mxu0 %v327
        %v511 = vpop.f32.mrb[0].mxu0
        %v512 = vadd.f32 0.0, %v511
        %v513 = vpop.f32.mrb[0].mxu0
        %v514 = vpop.f32.mrb[0].mxu0
        %v515 = vadd.f32 0.0, %v514
        %v516 = vpop.f32.mrb[0].mxu0
        %517 = vmatprep.mubr.bf16.mxu0 0
        %518 = vmatmul.mubr.bf16.gmra.mrb[0].mxu0 %v328
        %v519 = vpop.f32.mrb[0].mxu0
        %v520 = vadd.f32 0.0, %v519
        %v521 = vpop.f32.mrb[0].mxu0
        %v522 = vpop.f32.mrb[0].mxu0
        %v523 = vadd.f32 0.0, %v522
        %v524 = vpop.f32.mrb[0].mxu0
        %525 = vmatprep.mubr.bf16.mxu0 0
        %526 = vmatmul.mubr.bf16.gmra.mrb[0].mxu0 %v329
        %v527 = vpop.f32.mrb[0].mxu0
        %v528 = vadd.f32 0.0, %v527
        %v529 = vpop.f32.mrb[0].mxu0
        %v530 = vpop.f32.mrb[0].mxu0
        %v531 = vadd.f32 0.0, %v530
        %v532 = vpop.f32.mrb[0].mxu0
        %533 = vmatprep.mubr.bf16.mxu0 0
        %534 = vmatmul.mubr.bf16.gmra.mrb[0].mxu0 %v330
        %v535 = vpop.f32.mrb[0].mxu0
        %v536 = vadd.f32 0.0, %v535
        %v537 = vpop.f32.mrb[0].mxu0
        %v538 = vpop.f32.mrb[0].mxu0
        %v539 = vadd.f32 0.0, %v538
        %v540 = vpop.f32.mrb[0].mxu0
        %541 = vmatprep.mubr.bf16.mxu0 0
        %542 = vmatmul.mubr.bf16.gmra.mrb[0].mxu0 %v331
        %v543 = vpop.f32.mrb[0].mxu0
        %v544 = vadd.f32 0.0, %v543
        %v545 = vpop.f32.mrb[0].mxu0
        %v546 = vpop.f32.mrb[0].mxu0
        %v547 = vadd.f32 0.0, %v546
        %v548 = vpop.f32.mrb[0].mxu0
        %549 = vmatprep.mubr.bf16.mxu0 0
        %550 = vmatmul.mubr.bf16.gmra.mrb[0].mxu0 %v332
        %v551 = vpop.f32.mrb[0].mxu0
        %v552 = vadd.f32 0.0, %v551
        %v553 = vpop.f32.mrb[0].mxu0
        %v554 = vpop.f32.mrb[0].mxu0
        %v555 = vadd.f32 0.0, %v554
        %v556 = vpop.f32.mrb[0].mxu0
        %557 = vdwg.mxu0
        %v558 = vmax.f32 %v432, %v440
        %v559 = vmax.f32 %v435, %v443
        %v560 = vmax.f32 %v558, %v448
        %v561 = vmax.f32 %v559, %v451
        %v562 = vmax.f32 %v560, %v456
        %v563 = vmax.f32 %v561, %v459
        %v564 = vmax.f32 %v562, %v464
        %v565 = vmax.f32 %v563, %v467
        %v566 = vmax.f32 %v564, %v472
        %v567 = vmax.f32 %v565, %v475
        %v568 = vmax.f32 %v566, %v480
        %v569 = vmax.f32 %v567, %v483
        %v570 = vmax.f32 %v568, %v488
        %v571 = vmax.f32 %v569, %v491
        %v572 = vmax.f32 %v570, %v496
        %v573 = vmax.f32 %v571, %v499
        %v574 = vmax.f32 %v572, %v504
        %v575 = vmax.f32 %v573, %v507
        %v576 = vmax.f32 %v574, %v512
        %v577 = vmax.f32 %v575, %v515
        %v578 = vmax.f32 %v576, %v520
        %v579 = vmax.f32 %v577, %v523
        %v580 = vmax.f32 %v578, %v528
        %v581 = vmax.f32 %v579, %v531
        %v582 = vmax.f32 %v580, %v536
        %v583 = vmax.f32 %v581, %v539
        %v584 = vmax.f32 %v582, %v544
        %v585 = vmax.f32 %v583, %v547
        %v586 = vmax.f32 %v584, %v552
        %v587 = vmax.f32 %v585, %v555
        %v588 = vld [vmem:[%s2] sm:$0x1]
        %v590 = vlaneseq
        %v591 = vshrl.u32 %v590, 7
        %v592 = vsub.s32 0, %v591
        %v593 = vrot.slane %v588, %v592
        %v595 = vadd.f32 %v586, %v593
        %v596 = vadd.f32 %v587, %v593
        %597 = vst [vmem:[%s203] sm:$0xff] %v595
        %598 = vst [vmem:[%s203 + $0x8] sm:$0xff] %v596
        %s599 = sand.u32 %s97, 1
        %s600 = scalar_lea.sflag [#allocation4], %s599
        %s601 = sand.u32 %s97, 1
        %s602 = smul.addr %s601, 16
        %s603 = scalar_lea.vmem [#allocation7], %s602
        // Predicated region
        $region41: #{tpu_custom_call.1} parent=31 // pred_check
          %p604 = pneg %p107
        $region42: #{tpu_custom_call.1} parent=31 // pred_check_branch
          %606 = sbr.rel (%p604) target = $region44
        $region43: #{tpu_custom_call.1} parent=31 // pred_region
          %s608 = ssub.s32 256, 256
          %609 = vsyncadd %s600, %s608
          %s610 = smul.addr %s21, 2
          %s611 = smul.addr %s610, 128
          %s612 = scalar_lea.hbm %s3, %s611
          %s613 = sshll.u32 %s603, 4
          %s614 = int_to_ptr.vmem [resolvable:$true] %s613
          %619 = dma.vmem_to_hbm [thread:$0]  %s614, 256, %s612, %s600, 128, 128, 8
        $region44: #{tpu_custom_call.1} parent=31 // pred_fallthru
          _
      $region32: #{tpu_custom_call.1} parent=5 // pred_fallthru
        _
      %p620 = scmp.le.s32.totalorder 2, %s16
      // Predicated region
      $region45: #{tpu_custom_call.1} parent=5 // pred_check
        %p621 = pneg %p620
      $region46: #{tpu_custom_call.1} parent=5 // pred_check_branch
        %623 = sbr.rel (%p621) target = $region48
      $region47: #{tpu_custom_call.1} parent=5 // pred_region
        %s624 = ssub.s32 %s16, 2
        // Predicated region
        $region49: #{tpu_custom_call.1} parent=47 // pred_check
          %p625 = pneg %p113
        $region50: #{tpu_custom_call.1} parent=47 // pred_check_branch
          %627 = sbr.rel (%p625) target = $region52
        $region51: #{tpu_custom_call.1} parent=47 // pred_region
          %s628 = sand.u32 %s98, 1
          %s629 = scalar_lea.sflag [#allocation4], %s628
          %s630 = sand.u32 %s98, 1
          %s631 = smul.addr %s630, 16
          %s632 = scalar_lea.vmem [#allocation7], %s631
          %633 = dma.done %s629, 256
        $region52: #{tpu_custom_call.1} parent=47 // pred_fallthru
          _
      $region48: #{tpu_custom_call.1} parent=5 // pred_fallthru
        _
    $region6: #{tpu_custom_call.1} parent=1 // loop_footer
      %s20 = sadd.s32 1, %s16
    $region7: #{tpu_custom_call.1} parent=1 // loop_footer_branch
      %15 = sbr.rel target = $region3
    $region8: #{tpu_custom_call.1} parent=1 // loop_exit
      _
    %634 = vsyncpa [#allocation3], 1
    %s635 = scalar_lea.sflag [#allocation3], 1
    %636 = vsyncpa %s635, 1
    %637 = vsyncpa [#allocation6], 1
    %638 = vsyncpa [#allocation4], 1
    %s639 = scalar_lea.sflag [#allocation4], 1
    %640 = vsyncpa %s639, 1

</llo_original>
